<compile_context>
chip_gen: v7x
topology: tpu7x:2x2x1
jax: 0.10.0
libtpu: 0.0.40
codegen_flags: <defaults>
</compile_context>

<pallas_src>
import jax
import jax.numpy as jnp
from jax import lax
from jax.experimental import pallas as pl
from jax.experimental.pallas import tpu as pltpu


_SUB_TILE = 512                       # compute sub-tile (pixels); keeps h in vregs
_DEFAULT_MAX_TILE = 65536             # max pixels per DMA tile
_VMEM_TILE_BUDGET = 12 * 1024 * 1024  # double-buffered in+out tile budget (fits v5e's
                                      # 16 MiB default scoped VMEM, v7x's 64 MiB VMEM)


def _make_ca_kernel(sub_t):
    def kernel(x_ref, w1_ref, b1_ref, w2_ref, b2_ref, o_ref):
        # x_ref: (Cin, T)   w1: (Hd, Cin)  b1: (Hd, 1)
        # w2: (Cout, Hd)    b2: (Cout, 1)  o_ref: (Cout, T)
        w1 = w1_ref[...]
        b1 = b1_ref[...]
        w2 = w2_ref[...]
        b2 = b2_ref[...]
        T = x_ref.shape[-1]

        def mlp(xt):
            h = jnp.dot(w1, xt.astype(jnp.float32),
                        preferred_element_type=jnp.float32)
            h = jnp.maximum(h + b1, 0.0)
            o = jnp.dot(w2, h, preferred_element_type=jnp.float32) + b2
            return o.astype(o_ref.dtype)

        if T <= sub_t:
            # Small tile: single shot.
            o_ref[...] = mlp(x_ref[...])
        else:
            # Large DMA tile: walk it in register-resident sub-tiles.
            n_full = T // sub_t

            def body(i, carry):
                off = pl.multiple_of(i * sub_t, 128)
                o_ref[:, pl.ds(off, sub_t)] = mlp(x_ref[:, pl.ds(off, sub_t)])
                return carry

            lax.fori_loop(0, n_full, body, 0)
            rem = T - n_full * sub_t
            if rem:
                off = n_full * sub_t
                o_ref[:, pl.ds(off, rem)] = mlp(x_ref[:, pl.ds(off, rem)])

    return kernel


def _pick_pixel_tile(pix, n_outer, itemsize, cin, cout, *,
                     max_tile, sub_t, vmem_budget):
    """Largest lane-dense (multiple-of-128) pixel tile that fits the VMEM budget."""
    per_pix = 2 * (cin + cout) * itemsize           # double-buffered in + out bytes/pixel
    cap = min(max_tile, vmem_budget // per_pix)
    cap = max(128, (cap // 128) * 128)
    if pix <= cap:
        t = pix                                     # one exact block per image
    else:
        t = cap if cap <= sub_t else (cap // sub_t) * sub_t
    # v7x has 2 TensorCores: keep >= 2 blocks on the 'parallel' grid when possible.
    if n_outer * pl.cdiv(pix, t) < 2 and pix > 128:
        t = max(128, ((pl.cdiv(pix, 2) + 127) // 128) * 128)
    return t


def ca_model_forward(x_nchw, w1, b1, w2, b2, *,
                     max_pix_tile=_DEFAULT_MAX_TILE,
                     sub_tile=_SUB_TILE,
                     io_dtype=None,
                     vmem_tile_budget=_VMEM_TILE_BUDGET):
    """CAModel forward: conv2(relu(conv1(x))) with 1x1 convs.
    x_nchw: (N, Cin, H, W).  w1: (Hd, Cin), b1: (Hd,), w2: (Cout, Hd), b2: (Cout,)
    (native PyTorch (out, in) conv-weight layout — no transposes needed).
    io_dtype=jnp.bfloat16 halves HBM traffic (accumulation stays f32)."""
    N, Cin, H, W = x_nchw.shape
    Hd = w1.shape[0]
    Cout = w2.shape[0]
    HW = H * W

    # NCHW -> (N, C, H*W): free reshape; channels -> sublanes, pixels -> lanes.
    x = x_nchw.reshape(N, Cin, HW)

    # Tiny images: fold the batch into the lane axis (one small transpose) so the
    # stores stay lane-dense and we don't pay per-image grid-step overhead.
    fold_batch = HW < 128 and N > 1
    if fold_batch:
        x = jnp.transpose(x, (1, 0, 2)).reshape(1, Cin, N * HW)
        n_eff, pix = 1, N * HW
    else:
        n_eff, pix = N, HW

    if io_dtype is not None and x.dtype != io_dtype:
        x = x.astype(io_dtype)
    out_dtype = x.dtype
    itemsize = jnp.dtype(out_dtype).itemsize

    t_pix = _pick_pixel_tile(pix, n_eff, itemsize, Cin, Cout,
                             max_tile=max_pix_tile, sub_t=sub_tile,
                             vmem_budget=vmem_tile_budget)
    n_pix_blocks = pl.cdiv(pix, t_pix)   # ragged last block handled by Pallas

    w1f = w1.astype(jnp.float32)
    w2f = w2.astype(jnp.float32)
    b1_2d = b1.astype(jnp.float32).reshape(Hd, 1)
    b2_2d = b2.astype(jnp.float32).reshape(Cout, 1)

    param_bytes = 4 * (w1f.size + b1_2d.size + w2f.size + b2_2d.size)
    cost = pl.CostEstimate(
        flops=2 * n_eff * pix * (Hd * Cin + Cout * Hd),
        transcendentals=0,
        bytes_accessed=n_eff * pix * (Cin + Cout) * itemsize + param_bytes)

    # Only raise the scoped-VMEM limit if the working set approaches the smallest
    # default (16 MiB on v5e); cap well under v7x's 64 MiB physical VMEM.
    vmem_need = 2 * (Cin + Cout) * itemsize * t_pix + 2 * param_bytes
    vmem_limit = (int(min(max(2 * vmem_need, 32 * 1024 * 1024), 48 * 1024 * 1024))
                  if vmem_need > 12 * 1024 * 1024 else None)

    out = pl.pallas_call(
        _make_ca_kernel(sub_tile),
        out_shape=jax.ShapeDtypeStruct((n_eff, Cout, pix), out_dtype),
        grid_spec=pltpu.PrefetchScalarGridSpec(
            num_scalar_prefetch=0,
            grid=(n_eff, n_pix_blocks),
            in_specs=[
                pl.BlockSpec((None, Cin, t_pix), lambda n, p: (n, 0, p)),
                pl.BlockSpec((Hd, Cin), lambda n, p: (0, 0)),
                pl.BlockSpec((Hd, 1), lambda n, p: (0, 0)),
                pl.BlockSpec((Cout, Hd), lambda n, p: (0, 0)),
                pl.BlockSpec((Cout, 1), lambda n, p: (0, 0)),
            ],
            out_specs=pl.BlockSpec((None, Cout, t_pix), lambda n, p: (n, 0, p)),
        ),
        compiler_params=pltpu.CompilerParams(
            dimension_semantics=("parallel", "parallel"),
            vmem_limit_bytes=vmem_limit),
        cost_estimate=cost,
    )(x, w1f, b1_2d, w2f, b2_2d)

    if fold_batch:
        out = out.reshape(Cout, N, HW).transpose(1, 0, 2)
    return out.reshape(N, Cout, H, W)


def init_params(key, env_d, hidden_d):
    """Mirror the module's __init__:
    conv1: Conv2d(env_d*3, hidden_d, 1) -> weight (hidden_d, env_d*3), bias (hidden_d,)
    conv2: Conv2d(hidden_d, env_d, 1)   -> weight/bias zero-initialized."""
    cin = env_d * 3
    k1, k2 = jax.random.split(key)
    bound1 = 1.0 / jnp.sqrt(cin)
    w1 = jax.random.uniform(k1, (hidden_d, cin), jnp.float32, -bound1, bound1)
    b1 = jax.random.uniform(k2, (hidden_d,), jnp.float32, -bound1, bound1)
    w2 = jnp.zeros((env_d, hidden_d), jnp.float32)
    b2 = jnp.zeros((env_d,), jnp.float32)
    return w1, b1, w2, b2


def ref_forward(x, w1, b1, w2, b2):
    """Plain-JAX reference of the same forward (per-pixel MLP)."""
    N, Cin, H, W = x.shape
    xf = x.reshape(N, Cin, H * W)
    h = jnp.maximum(jnp.einsum("oc,ncp->nop", w1, xf) + b1[None, :, None], 0.0)
    o = jnp.einsum("oh,nhp->nop", w2, h) + b2[None, :, None]
    return o.reshape(N, w2.shape[0], H, W)


# TODO(synk): pack_layer / export_pytorch_ca_to_webgl_demo are host-side
# serialization utilities (base64/json), not part of the forward pass — not ported.

if __name__ == "__main__":
    env_d = 4
    hidden_d = 32
    N, H, W = 2, 16, 16
    Cin = env_d * 3  # 12

    key = jax.random.PRNGKey(0)
    kx, kp, kw2, kb2 = jax.random.split(key, 4)
    x = jax.random.normal(kx, (N, Cin, H, W), jnp.float32)

    # (1) Faithful module init (conv2 zero-initialized, as in the PyTorch spec).
    w1, b1, w2, b2 = init_params(kp, env_d, hidden_d)
    out = jax.block_until_ready(ca_model_forward(x, w1, b1, w2, b2))
    assert out.shape == (N, env_d, H, W)
    assert jnp.allclose(out, ref_forward(x, w1, b1, w2, b2), atol=1e-5, rtol=1e-5)

    # (2) Non-zero conv2 so both matmuls + biases are exercised.
    w2r = jax.random.normal(kw2, (env_d, hidden_d), jnp.float32) * 0.1
    b2r = jax.random.normal(kb2, (env_d,), jnp.float32) * 0.1
    out2 = jax.block_until_ready(ca_model_forward(x, w1, b1, w2r, b2r))
    assert jnp.allclose(out2, ref_forward(x, w1, b1, w2r, b2r), atol=1e-4, rtol=1e-4)

    # (3) Non-tile-divisible image + single batch: ragged last block (no wrapper
    #     pad/slice) and >= 2 grid blocks (keeps both v7x TCs busy).
    x3 = jax.random.normal(kx, (1, Cin, 20, 20), jnp.float32)
    out3 = jax.block_until_ready(ca_model_forward(x3, w1, b1, w2r, b2r))
    assert jnp.allclose(out3, ref_forward(x3, w1, b1, w2r, b2r), atol=1e-4, rtol=1e-4)

    # (4) Tiny image: batch folded into the lane axis (lane-dense stores).
    x4 = jax.random.normal(kx, (2, Cin, 8, 8), jnp.float32)
    out4 = jax.block_until_ready(ca_model_forward(x4, w1, b1, w2r, b2r))
    assert jnp.allclose(out4, ref_forward(x4, w1, b1, w2r, b2r), atol=1e-4, rtol=1e-4)

    # (5) bf16 I/O path: halves HBM bytes, f32 accumulation (looser numerics).
    out5 = jax.block_until_ready(
        ca_model_forward(x, w1, b1, w2r, b2r, io_dtype=jnp.bfloat16))
    assert out5.dtype == jnp.bfloat16
    x_q = x.astype(jnp.bfloat16).astype(jnp.float32)
    assert jnp.allclose(out5.astype(jnp.float32),
                        ref_forward(x_q, w1, b1, w2r, b2r), atol=0.05, rtol=0.05)

    print("KERNEL_OK")
</pallas_src>

<mosaic_0001>
module attributes {stable_mosaic.version = 11 : i64} {
  func.func @kernel(%arg0: i32, %arg1: i32, %arg2: memref<1x12x256xf32, #tpu.memory_space<vmem>>, %arg3: memref<32x12xf32, #tpu.memory_space<vmem>>, %arg4: memref<32x1xf32, #tpu.memory_space<vmem>>, %arg5: memref<4x32xf32, #tpu.memory_space<vmem>>, %arg6: memref<4x1xf32, #tpu.memory_space<vmem>>, %arg7: memref<1x4x256xf32, #tpu.memory_space<vmem>>) attributes {dimension_semantics = [#tpu.dimension_semantics<parallel>, #tpu.dimension_semantics<parallel>], iteration_bounds = array<i64: 2, 1>, scalar_prefetch = 0 : i64, scratch_operands = 0 : i64, tpu.core_type = #tpu.core_type<tc>, window_params = [{transform_indices = @transform_0, window_bounds = array<i64: 1, 12, 256>}, {pipeline_mode = #tpu.pipeline_mode<synchronous>, transform_indices = @transform_1, window_bounds = array<i64: 32, 12>}, {pipeline_mode = #tpu.pipeline_mode<synchronous>, transform_indices = @transform_2, window_bounds = array<i64: 32, 1>}, {pipeline_mode = #tpu.pipeline_mode<synchronous>, transform_indices = @transform_3, window_bounds = array<i64: 4, 32>}, {pipeline_mode = #tpu.pipeline_mode<synchronous>, transform_indices = @transform_4, window_bounds = array<i64: 4, 1>}, {transform_indices = @transform_5, window_bounds = array<i64: 1, 4, 256>}]} {
    %c0 = arith.constant 0 : index
    %c0_0 = arith.constant 0 : index
    %0 = vector.load %arg3[%c0, %c0_0] : memref<32x12xf32, #tpu.memory_space<vmem>>, vector<32x12xf32>
    %c0_1 = arith.constant 0 : index
    %c0_2 = arith.constant 0 : index
    %1 = vector.load %arg4[%c0_1, %c0_2] : memref<32x1xf32, #tpu.memory_space<vmem>>, vector<32x1xf32>
    %c0_3 = arith.constant 0 : index
    %c0_4 = arith.constant 0 : index
    %2 = vector.load %arg5[%c0_3, %c0_4] : memref<4x32xf32, #tpu.memory_space<vmem>>, vector<4x32xf32>
    %c0_5 = arith.constant 0 : index
    %c0_6 = arith.constant 0 : index
    %3 = vector.load %arg6[%c0_5, %c0_6] : memref<4x1xf32, #tpu.memory_space<vmem>>, vector<4x1xf32>
    %c0_7 = arith.constant 0 : index
    %c0_8 = arith.constant 0 : index
    %c0_9 = arith.constant 0 : index
    %4 = vector.load %arg2[%c0_7, %c0_8, %c0_9] : memref<1x12x256xf32, #tpu.memory_space<vmem>>, vector<1x12x256xf32>
    %5 = vector.shape_cast %4 : vector<1x12x256xf32> to vector<12x256xf32>
    %cst = arith.constant dense<0.000000e+00> : vector<32x256xf32>
    %6 = tpu.matmul %0, %5, %cst {dimension_numbers = #tpu.dot_dimension_numbers<[1], [0], [0], [1], [0, 0, 1, 1], [], []>} : vector<32x12xf32>, vector<12x256xf32>, vector<32x256xf32> -> vector<32x256xf32>
    %7 = vector.broadcast %1 : vector<32x1xf32> to vector<32x256xf32>
    %8 = arith.addf %6, %7 : vector<32x256xf32>
    %cst_10 = arith.constant 0.000000e+00 : f32
    %9 = vector.broadcast %cst_10 : f32 to vector<32x256xf32>
    %10 = arith.maximumf %8, %9 : vector<32x256xf32>
    %cst_11 = arith.constant dense<0.000000e+00> : vector<4x256xf32>
    %11 = tpu.matmul %2, %10, %cst_11 {dimension_numbers = #tpu.dot_dimension_numbers<[1], [0], [0], [1], [0, 0, 1, 1], [], []>} : vector<4x32xf32>, vector<32x256xf32>, vector<4x256xf32> -> vector<4x256xf32>
    %12 = vector.broadcast %3 : vector<4x1xf32> to vector<4x256xf32>
    %13 = arith.addf %11, %12 : vector<4x256xf32>
    %c0_12 = arith.constant 0 : index
    %c0_13 = arith.constant 0 : index
    %c0_14 = arith.constant 0 : index
    %14 = vector.load %arg7[%c0_12, %c0_13, %c0_14] : memref<1x4x256xf32, #tpu.memory_space<vmem>>, vector<1x4x256xf32>
    %15 = vector.shape_cast %14 : vector<1x4x256xf32> to vector<4x256xf32>
    %16 = vector.shape_cast %13 : vector<4x256xf32> to vector<1x4x256xf32>
    tpu.vector_store %arg7[%c0_12, %c0_13, %c0_14], %16 {strides = array<i32>} : memref<1x4x256xf32, #tpu.memory_space<vmem>>, vector<1x4x256xf32>,
    return
  }
  func.func @transform_0(%arg0: i32, %arg1: i32) -> (i32, i32, i32) {
    %c0_i32 = arith.constant 0 : i32
    %c0_i32_0 = arith.constant 0 : i32
    return %arg0, %c0_i32, %arg1 : i32, i32, i32
  }
  func.func @transform_1(%arg0: i32, %arg1: i32) -> (i32, i32) {
    %c0_i32 = arith.constant 0 : i32
    %c0_i32_0 = arith.constant 0 : i32
    %c0_i32_1 = arith.constant 0 : i32
    return %c0_i32, %c0_i32_0 : i32, i32
  }
  func.func @transform_2(%arg0: i32, %arg1: i32) -> (i32, i32) {
    %c0_i32 = arith.constant 0 : i32
    %c0_i32_0 = arith.constant 0 : i32
    %c0_i32_1 = arith.constant 0 : i32
    return %c0_i32, %c0_i32_0 : i32, i32
  }
  func.func @transform_3(%arg0: i32, %arg1: i32) -> (i32, i32) {
    %c0_i32 = arith.constant 0 : i32
    %c0_i32_0 = arith.constant 0 : i32
    %c0_i32_1 = arith.constant 0 : i32
    return %c0_i32, %c0_i32_0 : i32, i32
  }
  func.func @transform_4(%arg0: i32, %arg1: i32) -> (i32, i32) {
    %c0_i32 = arith.constant 0 : i32
    %c0_i32_0 = arith.constant 0 : i32
    %c0_i32_1 = arith.constant 0 : i32
    return %c0_i32, %c0_i32_0 : i32, i32
  }
  func.func @transform_5(%arg0: i32, %arg1: i32) -> (i32, i32, i32) {
    %c0_i32 = arith.constant 0 : i32
    %c0_i32_0 = arith.constant 0 : i32
    return %arg0, %c0_i32, %arg1 : i32, i32, i32
  }
}

</mosaic_0001>

<llo_original>
// kernel: tpu_custom_call.1
$region0: #{tpu_custom_call.1}
  #allocation0 [shape = 'u32[]', space=smem, size = 0x4, offset = 0x4, fixed_abs, tag = 'smem constant byte address 0x4 - core index']
  #allocation1 [shape = 'u32[144,128]{1,0:T(1,128)}', space=vmem, size = 0x12000, scoped, tag = 'internal scratch']
  %s0 = inlined_call_operand.vmem [shape: f32[2,12,256], index: 0, kind: input, shape index: {}]
  %s1 = inlined_call_operand.vmem [shape: f32[32,12], index: 1, kind: input, shape index: {}]
  %s2 = inlined_call_operand.vmem [shape: f32[32,1], index: 2, kind: input, shape index: {}]
  %s3 = inlined_call_operand.vmem [shape: f32[4,32], index: 3, kind: input, shape index: {}]
  %s4 = inlined_call_operand.vmem [shape: f32[4,1], index: 4, kind: input, shape index: {}]
  %s5 = inlined_call_operand.hbm [shape: f32[2,4,256], index: 5, kind: output, shape index: {}]
  %s6 = sld [smem:[#allocation0]]
  $region53: #{tpu_custom_call.1} parent=0
    _
  %s8 = ssub.s32 1, %s6
  %s9 = scalar_select 0, %s8, %s6
  $region1: #{tpu_custom_call.1} parent=0
    #allocation2 [shape = 'u8[8192]{0}', space=vmem, size = 0x2000, scoped, tag = 'output window, operand 0']
    #allocation3 [shape = 's32[2]{0}', space=sflag, size = 0x8, scoped, tag = 'scoped memory for tpu_custom_call.1']
    %10 = vsyncpa [#allocation3], 0
    %s11 = scalar_lea.sflag [#allocation3], 1
    %12 = vsyncpa %s11, 0
    loop: start=0, step=1, limit=4
    $region2: #{tpu_custom_call.1} parent=1 // loop_pre_header
      _
    $region3: #{tpu_custom_call.1} parent=1 // loop_header
      %s14 = sphi 0, %s18
      %p15 = scmp.ge.s32.totalorder %s14, 4
      %s21 = sphi 0, %s33
      %s22 = sphi 0, %s29
      %s23 = sphi 0, %s21
      %s24 = sphi 0, %s22
      %s25 = sphi 0, %s23
      %s26 = sphi 0, %s24
      %s38 = sphi 0, %s40
      %s41 = sphi 0, %s38
      %s42 = sphi 0, %s41
      %s58 = sphi 0, %s42
      %s62 = sphi 0, %s62
      %s64 = sphi 0, %s62
      %s65 = sphi 0, %s64
      %s79 = sphi 0, %s65
      %s83 = sphi 0, %s83
      %s85 = sphi 0, %s83
      %s86 = sphi 0, %s85
      %s100 = sphi 0, %s86
      %s104 = sphi 0, %s104
      %s106 = sphi 0, %s104
      %s107 = sphi 0, %s106
      %s121 = sphi 0, %s107
      %s125 = sphi 0, %s125
      %s127 = sphi 0, %s125
      %s128 = sphi 0, %s127
      %s142 = sphi 0, %s128
      %s150 = sphi 0, %s152
      %s153 = sphi 0, %s150
      %s154 = sphi 0, %s153
      %s170 = sphi 0, %s154
    $region4: #{tpu_custom_call.1} parent=1 // loop_header_branch
      %17 = sbr.rel (%p15) target = $region8
    $region5: #{tpu_custom_call.1} parent=1 // loop_body
      %s19 = ssub.s32 %s14, 1
      %s20 = ssub.s32 %s14, 2
      %s27 = sadd.s32 1, %s22
      %p28 = scmp.ge.s32.totalorder %s27, 1
      %s29 = scalar_select %p28, 0, %s27
      %s30 = sadd.s32 1, %s21
      %s31 = scalar_select %p28, %s30, %s21
      %p32 = scmp.ge.s32.totalorder %s31, 2
      %s33 = scalar_select %p32, 0, %s31
      %s34 = ssub.s32 %s21, %s33
      %s35 = ssub.s32 %s22, %s29
      %s36 = sor.u32 %s34, %s35
      %p37 = scmp.eq.s32.totalorder %s36, 0
      %s39 = sadd.s32 %s38, 1
      %s40 = scalar_select %p37, %s38, %s39
      %p43 = pneg %p37
      %p44 = scmp.eq.s32.totalorder %s14, 1
      %p45 = por %p43, %p44
      %p46 = scmp.ne.s32.totalorder %s38, %s41
      %p47 = scmp.eq.s32.totalorder %s14, 0
      %p48 = por %p46, %p47
      %p49 = scmp.ne.s32.totalorder %s38, %s41
      %p50 = scmp.eq.s32.totalorder %s19, 1
      %p51 = por %p49, %p50
      %p52 = scmp.ne.s32.totalorder %s41, %s42
      %p53 = scmp.eq.s32.totalorder %s19, 0
      %p54 = por %p52, %p53
      %p55 = scmp.ne.s32.totalorder %s41, %s42
      %p56 = scmp.eq.s32.totalorder %s20, 1
      %p57 = por %p55, %p56
      %p59 = scmp.ne.s32.totalorder %s42, %s58
      %p60 = scmp.eq.s32.totalorder %s20, 0
      %p61 = por %p59, %p60
      %s63 = sadd.s32 %s62, 1
      %p66 = scmp.eq.s32.totalorder %s14, 1
      %p67 = scmp.ne.s32.totalorder %s62, %s64
      %p68 = scmp.eq.s32.totalorder %s14, 0
      %p69 = por %p67, %p68
      %p70 = scmp.ne.s32.totalorder %s62, %s64
      %p71 = scmp.eq.s32.totalorder %s19, 1
      %p72 = por %p70, %p71
      %p73 = scmp.ne.s32.totalorder %s64, %s65
      %p74 = scmp.eq.s32.totalorder %s19, 0
      %p75 = por %p73, %p74
      %p76 = scmp.ne.s32.totalorder %s64, %s65
      %p77 = scmp.eq.s32.totalorder %s20, 1
      %p78 = por %p76, %p77
      %p80 = scmp.ne.s32.totalorder %s65, %s79
      %p81 = scmp.eq.s32.totalorder %s20, 0
      %p82 = por %p80, %p81
      %s84 = sadd.s32 %s83, 1
      %p87 = scmp.eq.s32.totalorder %s14, 1
      %p88 = scmp.ne.s32.totalorder %s83, %s85
      %p89 = scmp.eq.s32.totalorder %s14, 0
      %p90 = por %p88, %p89
      %p91 = scmp.ne.s32.totalorder %s83, %s85
      %p92 = scmp.eq.s32.totalorder %s19, 1
      %p93 = por %p91, %p92
      %p94 = scmp.ne.s32.totalorder %s85, %s86
      %p95 = scmp.eq.s32.totalorder %s19, 0
      %p96 = por %p94, %p95
      %p97 = scmp.ne.s32.totalorder %s85, %s86
      %p98 = scmp.eq.s32.totalorder %s20, 1
      %p99 = por %p97, %p98
      %p101 = scmp.ne.s32.totalorder %s86, %s100
      %p102 = scmp.eq.s32.totalorder %s20, 0
      %p103 = por %p101, %p102
      %s105 = sadd.s32 %s104, 1
      %p108 = scmp.eq.s32.totalorder %s14, 1
      %p109 = scmp.ne.s32.totalorder %s104, %s106
      %p110 = scmp.eq.s32.totalorder %s14, 0
      %p111 = por %p109, %p110
      %p112 = scmp.ne.s32.totalorder %s104, %s106
      %p113 = scmp.eq.s32.totalorder %s19, 1
      %p114 = por %p112, %p113
      %p115 = scmp.ne.s32.totalorder %s106, %s107
      %p116 = scmp.eq.s32.totalorder %s19, 0
      %p117 = por %p115, %p116
      %p118 = scmp.ne.s32.totalorder %s106, %s107
      %p119 = scmp.eq.s32.totalorder %s20, 1
      %p120 = por %p118, %p119
      %p122 = scmp.ne.s32.totalorder %s107, %s121
      %p123 = scmp.eq.s32.totalorder %s20, 0
      %p124 = por %p122, %p123
      %s126 = sadd.s32 %s125, 1
      %p129 = scmp.eq.s32.totalorder %s14, 1
      %p130 = scmp.ne.s32.totalorder %s125, %s127
      %p131 = scmp.eq.s32.totalorder %s14, 0
      %p132 = por %p130, %p131
      %p133 = scmp.ne.s32.totalorder %s125, %s127
      %p134 = scmp.eq.s32.totalorder %s19, 1
      %p135 = por %p133, %p134
      %p136 = scmp.ne.s32.totalorder %s127, %s128
      %p137 = scmp.eq.s32.totalorder %s19, 0
      %p138 = por %p136, %p137
      %p139 = scmp.ne.s32.totalorder %s127, %s128
      %p140 = scmp.eq.s32.totalorder %s20, 1
      %p141 = por %p139, %p140
      %p143 = scmp.ne.s32.totalorder %s128, %s142
      %p144 = scmp.eq.s32.totalorder %s20, 0
      %p145 = por %p143, %p144
      %s146 = ssub.s32 %s21, %s33
      %s147 = ssub.s32 %s22, %s29
      %s148 = sor.u32 %s146, %s147
      %p149 = scmp.eq.s32.totalorder %s148, 0
      %s151 = sadd.s32 %s150, 1
      %s152 = scalar_select %p149, %s150, %s151
      %p155 = pneg %p149
      %p156 = scmp.eq.s32.totalorder %s14, 1
      %p157 = por %p155, %p156
      %p158 = scmp.ne.s32.totalorder %s150, %s153
      %p159 = scmp.eq.s32.totalorder %s14, 0
      %p160 = por %p158, %p159
      %p161 = scmp.ne.s32.totalorder %s150, %s153
      %p162 = scmp.eq.s32.totalorder %s19, 1
      %p163 = por %p161, %p162
      %p164 = scmp.ne.s32.totalorder %s153, %s154
      %p165 = scmp.eq.s32.totalorder %s19, 0
      %p166 = por %p164, %p165
      %p167 = scmp.ne.s32.totalorder %s153, %s154
      %p168 = scmp.eq.s32.totalorder %s20, 1
      %p169 = por %p167, %p168
      %p171 = scmp.ne.s32.totalorder %s154, %s170
      %p172 = scmp.eq.s32.totalorder %s20, 0
      %p173 = por %p171, %p172
      %p174 = scmp.le.s32.totalorder 1, %s14
      %p175 = scmp.lt.s32.totalorder %s14, 3
      %p176 = pnand %p174, %p175
      %p177 = pneg %p176
      // Predicated region
      $region9: #{tpu_custom_call.1} parent=5 // pred_check
        _
      $region10: #{tpu_custom_call.1} parent=5 // pred_check_branch
        %179 = sbr.rel (%p176) target = $region12
      $region11: #{tpu_custom_call.1} parent=5 // pred_region
        %s180 = ssub.s32 %s14, 1
        // Predicated region
        $region13: #{tpu_custom_call.1} parent=11 // pred_check
          %p181 = pneg %p75
        $region14: #{tpu_custom_call.1} parent=11 // pred_check_branch
          %183 = sbr.rel (%p181) target = $region16
        $region15: #{tpu_custom_call.1} parent=11 // pred_region
          _
        $region16: #{tpu_custom_call.1} parent=11 // pred_fallthru
          _
        // Predicated region
        $region17: #{tpu_custom_call.1} parent=11 // pred_check
          %p184 = pneg %p96
        $region18: #{tpu_custom_call.1} parent=11 // pred_check_branch
          %186 = sbr.rel (%p184) target = $region20
        $region19: #{tpu_custom_call.1} parent=11 // pred_region
          _
        $region20: #{tpu_custom_call.1} parent=11 // pred_fallthru
          _
        // Predicated region
        $region21: #{tpu_custom_call.1} parent=11 // pred_check
          %p187 = pneg %p117
        $region22: #{tpu_custom_call.1} parent=11 // pred_check_branch
          %189 = sbr.rel (%p187) target = $region24
        $region23: #{tpu_custom_call.1} parent=11 // pred_region
          _
        $region24: #{tpu_custom_call.1} parent=11 // pred_fallthru
          _
        // Predicated region
        $region25: #{tpu_custom_call.1} parent=11 // pred_check
          %p190 = pneg %p138
        $region26: #{tpu_custom_call.1} parent=11 // pred_check_branch
          %192 = sbr.rel (%p190) target = $region28
        $region27: #{tpu_custom_call.1} parent=11 // pred_region
          _
        $region28: #{tpu_custom_call.1} parent=11 // pred_fallthru
          _
      $region12: #{tpu_custom_call.1} parent=5 // pred_fallthru
        _
      %p193 = scmp.lt.s32.totalorder %s14, 2
      // Predicated region
      $region29: #{tpu_custom_call.1} parent=5 // pred_check
        %p194 = pneg %p193
      $region30: #{tpu_custom_call.1} parent=5 // pred_check_branch
        %196 = sbr.rel (%p194) target = $region32
      $region31: #{tpu_custom_call.1} parent=5 // pred_region
        // Predicated region
        $region33: #{tpu_custom_call.1} parent=31 // pred_check
          %p197 = pneg %p48
        $region34: #{tpu_custom_call.1} parent=31 // pred_check_branch
          %199 = sbr.rel (%p197) target = $region36
        $region35: #{tpu_custom_call.1} parent=31 // pred_region
          %s200 = smul.u32 2, %s22
          %p201 = scmp.lt.s32.totalorder %s21, 1
          %s202 = scalar_select %p201, %s21, 1
          %p203 = scmp.lt.s32.totalorder %s200, 1
          %s204 = scalar_select %p203, %s200, 1
          %s205 = smul.addr %s202, 4
          %s206 = sadd.s32 %s204, %s205
          %s207 = smul.addr %s206, 8
          %s208 = scalar_lea.vmem %s0, %s207
          %s209 = smul.u32 2, %s22
        $region36: #{tpu_custom_call.1} parent=31 // pred_fallthru
          _
      $region32: #{tpu_custom_call.1} parent=5 // pred_fallthru
        _
      %p210 = scmp.le.s32.totalorder 1, %s14
      %p211 = scmp.lt.s32.totalorder %s14, 3
      %p212 = pnand %p210, %p211
      %p213 = pneg %p212
      // Predicated region
      $region37: #{tpu_custom_call.1} parent=5 // pred_check
        _
      $region38: #{tpu_custom_call.1} parent=5 // pred_check_branch
        %215 = sbr.rel (%p212) target = $region40
      $region39: #{tpu_custom_call.1} parent=5 // pred_region
        %s216 = ssub.s32 %s14, 1
        %s217 = smul.u32 2, %s24
        %p218 = scmp.lt.s32.totalorder %s23, 1
        %s219 = scalar_select %p218, %s23, 1
        %p220 = scmp.lt.s32.totalorder %s217, 1
        %s221 = scalar_select %p220, %s217, 1
        %s222 = smul.addr %s219, 4
        %s223 = sadd.s32 %s221, %s222
        %s224 = smul.addr %s223, 8
        %s225 = scalar_lea.vmem %s0, %s224
        %p226 = pneg %p54
        %p227 = pneg %p51
        %p228 = pneg %p75
        %p229 = pneg %p72
        %p230 = pneg %p96
        %p231 = pneg %p93
        %p232 = pneg %p117
        %p233 = pneg %p114
        %p234 = pneg %p138
        %p235 = pneg %p135
        %p236 = pneg %p166
        %p237 = pneg %p163
        %s238 = sand.u32 %s153, 1
        %s239 = scalar_lea.sflag [#allocation3], %s238
        %s240 = sand.u32 %s153, 1
        %s241 = smul.addr %s240, 8
        %s242 = scalar_lea.vmem [#allocation2], %s241
        %s243 = smul.u32 2, %s24
        %p244 = scmp.lt.s32.totalorder %s23, 1
        %s245 = scalar_select %p244, %s23, 1
        %p246 = scmp.lt.s32.totalorder %s243, 1
        %s247 = scalar_select %p246, %s243, 1
        %s248 = smul.addr %s245, 4
        %s249 = sadd.s32 %s247, %s248
        %s250 = smul.addr %s249, 8
        %s251 = scalar_lea.vmem %s0, %s250
        %s252 = smul.u32 2, %s24
        %s253 = smul.u32 2, %s24
        %v254 = vld [vmem:[%s1] sm:$0xff]
        %v255 = vld [vmem:[%s1 + $0x8] sm:$0xff]
        %v256 = vld [vmem:[%s1 + $0x10] sm:$0xff]
        %v257 = vld [vmem:[%s1 + $0x18] sm:$0xff]
        %v258 = vld [vmem:[%s2] sm:$0xff]
        %v259 = vld [vmem:[%s2 + $0x8] sm:$0xff]
        %v260 = vld [vmem:[%s2 + $0x10] sm:$0xff]
        %v261 = vld [vmem:[%s2 + $0x18] sm:$0xff]
        %v262 = vld [vmem:[%s3] sm:$0xf]
        %v263 = vld [vmem:[%s4] sm:$0xf]
        %v264 = vld [vmem:[%s251] sm:$0xff]
        %v265 = vld [vmem:[%s251 + $0x8] sm:$0xff]
        %v266 = vld [vmem:[%s251 + $0x10] sm:$0xf]
        %v267 = vld [vmem:[%s251 + $0x18] sm:$0xf]
        %269 = vset.pattern.permute.xlu0 0
        %270 = vperm.xlu0 %269, %v258
        %v271 = vpop.permute.xlu0 %270
        %274 = vset.pattern.permute.xlu0 0
        %275 = vperm.xlu0 %274, %v259
        %v276 = vpop.permute.xlu0 %275
        %279 = vset.pattern.permute.xlu0 0
        %280 = vperm.xlu0 %279, %v260
        %v281 = vpop.permute.xlu0 %280
        %284 = vset.pattern.permute.xlu0 0
        %285 = vperm.xlu0 %284, %v261
        %v286 = vpop.permute.xlu0 %285
        %vm288 = vcmask 97280
        %v290 = vsel %vm288, %v254, 0
        %v293 = vsel %vm288, %v255, 0
        %v296 = vsel %vm288, %v256, 0
        %v299 = vsel %vm288, %v257, 0
        %vm301 = vcmask 1043456
        %v303 = vsel %vm301, %v266, 0
        %v306 = vsel %vm301, %v267, 0
        %308 = vmatprep.subr.mxu0 %v265
        %309 = vmatpush1.msra.mxu0 %v264
        %310 = vmatprep.subr.mxu0 %v306
        %311 = vmatpush1.msra.mxu0 %v303
        %312 = vmatprep.subr.mxu0 0.0
        %313 = vmatpush1.msra.mxu0 0.0
        %314 = vmatprep.subr.mxu0 0.0
        %315 = vmatpush1.msra.mxu0 0.0
        %316 = vmatprep.subr.mxu0 0.0
        %317 = vmatpush1.msra.mxu0 0.0
        %318 = vmatprep.subr.mxu0 0.0
        %319 = vmatpush1.msra.mxu0 0.0
        %320 = vmatprep.subr.mxu0 0.0
        %321 = vmatpush1.msra.mxu0 0.0
        %322 = vmatprep.subr.mxu0 0.0
        %323 = vmatpush1.msra.mxu0 0.0
        %324 = vmatprep.subr.mxu0 0.0
        %325 = vmatpush1.msra.mxu0 0.0
        %326 = vmatprep.subr.mxu0 0.0
        %327 = vmatpush1.msra.mxu0 0.0
        %328 = vmatprep.subr.mxu0 0.0
        %329 = vmatpush1.msra.mxu0 0.0
        %330 = vmatprep.subr.mxu0 0.0
        %331 = vmatpush1.msra.mxu0 0.0
        %332 = vmatprep.subr.mxu0 0.0
        %333 = vmatpush1.msra.mxu0 0.0
        %334 = vmatprep.subr.mxu0 0.0
        %335 = vmatpush1.msra.mxu0 0.0
        %336 = vmatprep.subr.mxu0 0.0
        %337 = vmatpush1.msra.mxu0 0.0
        %338 = vmatprep.subr.mxu0 0.0
        %339 = vmatpush1.msra.mxu0 0.0
        %340 = vmatprep.subr.mxu0 0.0
        %341 = vmatpush1.msra.mxu0 0.0
        %342 = vmatprep.subr.mxu0 0.0
        %343 = vmatpush1.msra.mxu0 0.0
        %344 = vmatprep.subr.mxu0 0.0
        %345 = vmatpush1.msra.mxu0 0.0
        %346 = vmatprep.subr.mxu0 0.0
        %347 = vmatpush1.msra.mxu0 0.0
        %348 = vmatprep.subr.mxu0 0.0
        %349 = vmatpush1.msra.mxu0 0.0
        %350 = vmatprep.subr.mxu0 0.0
        %351 = vmatpush1.msra.mxu0 0.0
        %352 = vmatprep.subr.mxu0 0.0
        %353 = vmatpush1.msra.mxu0 0.0
        %354 = vmatprep.subr.mxu0 0.0
        %355 = vmatpush1.msra.mxu0 0.0
        %356 = vmatprep.subr.mxu0 0.0
        %357 = vmatpush1.msra.mxu0 0.0
        %358 = vmatprep.subr.mxu0 0.0
        %359 = vmatpush1.msra.mxu0 0.0
        %360 = vmatprep.subr.mxu0 0.0
        %361 = vmatpush1.msra.mxu0 0.0
        %362 = vmatprep.subr.mxu0 0.0
        %363 = vmatpush1.msra.mxu0 0.0
        %364 = vmatprep.subr.mxu0 0.0
        %365 = vmatpush1.msra.mxu0 0.0
        %366 = vmatprep.subr.mxu0 0.0
        %367 = vmatpush1.msra.mxu0 0.0
        %368 = vmatprep.subr.mxu0 0.0
        %369 = vmatpush1.msra.mxu0 0.0
        %370 = vmatprep.subr.mxu0 0.0
        %371 = vmatpush1.msra.mxu0 0.0
        %372 = vmatprep.mubr.f32.mxu0 0.0
        %373 = vmatmul.mubr.f32.gmra.mrb[0].mxu0 %v290
        %v374 = vpop.f32.mrb[0].mxu0
        %v375 = vadd.f32 %v271, %v374
        %v376 = vpop.f32.mrb[0].mxu0
        %v377 = vadd.f32 %v271, %v376
        %378 = vmatprep.mubr.f32.mxu0 0.0
        %379 = vmatmul.mubr.f32.gmra.mrb[0].mxu0 %v293
        %v380 = vpop.f32.mrb[0].mxu0
        %v381 = vadd.f32 %v276, %v380
        %v382 = vpop.f32.mrb[0].mxu0
        %v383 = vadd.f32 %v276, %v382
        %384 = vmatprep.mubr.f32.mxu0 0.0
        %385 = vmatmul.mubr.f32.gmra.mrb[0].mxu0 %v296
        %v386 = vpop.f32.mrb[0].mxu0
        %v387 = vadd.f32 %v281, %v386
        %v388 = vpop.f32.mrb[0].mxu0
        %v389 = vadd.f32 %v281, %v388
        %390 = vmatprep.mubr.f32.mxu0 0.0
        %391 = vmatmul.mubr.f32.gmra.mrb[0].mxu0 %v299
        %v392 = vpop.f32.mrb[0].mxu0
        %v393 = vadd.f32 %v286, %v392
        %v394 = vpop.f32.mrb[0].mxu0
        %v395 = vadd.f32 %v286, %v394
        %396 = vdwg.mxu0
        %v397 = vmax.f32 %v375, 0.0
        %v398 = vmax.f32 %v377, 0.0
        %v399 = vmax.f32 %v381, 0.0
        %v400 = vmax.f32 %v383, 0.0
        %v401 = vmax.f32 %v387, 0.0
        %v402 = vmax.f32 %v389, 0.0
        %v403 = vmax.f32 %v393, 0.0
        %v404 = vmax.f32 %v395, 0.0
        %406 = vset.pattern.permute.xlu0 0
        %407 = vperm.xlu0 %406, %v263
        %v408 = vpop.permute.xlu0 %407
        %vm410 = vcmask 261120
        %v412 = vsel %vm410, %v262, 0
        %414 = vmatprep.subr.mxu0 %v398
        %415 = vmatpush1.msra.mxu0 %v397
        %416 = vmatprep.subr.mxu0 %v400
        %417 = vmatpush1.msra.mxu0 %v399
        %418 = vmatprep.subr.mxu0 %v402
        %419 = vmatpush1.msra.mxu0 %v401
        %420 = vmatprep.subr.mxu0 %v404
        %421 = vmatpush1.msra.mxu0 %v403
        %422 = vmatprep.subr.mxu0 0.0
        %423 = vmatpush1.msra.mxu0 0.0
        %424 = vmatprep.subr.mxu0 0.0
        %425 = vmatpush1.msra.mxu0 0.0
        %426 = vmatprep.subr.mxu0 0.0
        %427 = vmatpush1.msra.mxu0 0.0
        %428 = vmatprep.subr.mxu0 0.0
        %429 = vmatpush1.msra.mxu0 0.0
        %430 = vmatprep.subr.mxu0 0.0
        %431 = vmatpush1.msra.mxu0 0.0
        %432 = vmatprep.subr.mxu0 0.0
        %433 = vmatpush1.msra.mxu0 0.0
        %434 = vmatprep.subr.mxu0 0.0
        %435 = vmatpush1.msra.mxu0 0.0
        %436 = vmatprep.subr.mxu0 0.0
        %437 = vmatpush1.msra.mxu0 0.0
        %438 = vmatprep.subr.mxu0 0.0
        %439 = vmatpush1.msra.mxu0 0.0
        %440 = vmatprep.subr.mxu0 0.0
        %441 = vmatpush1.msra.mxu0 0.0
        %442 = vmatprep.subr.mxu0 0.0
        %443 = vmatpush1.msra.mxu0 0.0
        %444 = vmatprep.subr.mxu0 0.0
        %445 = vmatpush1.msra.mxu0 0.0
        %446 = vmatprep.subr.mxu0 0.0
        %447 = vmatpush1.msra.mxu0 0.0
        %448 = vmatprep.subr.mxu0 0.0
        %449 = vmatpush1.msra.mxu0 0.0
        %450 = vmatprep.subr.mxu0 0.0
        %451 = vmatpush1.msra.mxu0 0.0
        %452 = vmatprep.subr.mxu0 0.0
        %453 = vmatpush1.msra.mxu0 0.0
        %454 = vmatprep.subr.mxu0 0.0
        %455 = vmatpush1.msra.mxu0 0.0
        %456 = vmatprep.subr.mxu0 0.0
        %457 = vmatpush1.msra.mxu0 0.0
        %458 = vmatprep.subr.mxu0 0.0
        %459 = vmatpush1.msra.mxu0 0.0
        %460 = vmatprep.subr.mxu0 0.0
        %461 = vmatpush1.msra.mxu0 0.0
        %462 = vmatprep.subr.mxu0 0.0
        %463 = vmatpush1.msra.mxu0 0.0
        %464 = vmatprep.subr.mxu0 0.0
        %465 = vmatpush1.msra.mxu0 0.0
        %466 = vmatprep.subr.mxu0 0.0
        %467 = vmatpush1.msra.mxu0 0.0
        %468 = vmatprep.subr.mxu0 0.0
        %469 = vmatpush1.msra.mxu0 0.0
        %470 = vmatprep.subr.mxu0 0.0
        %471 = vmatpush1.msra.mxu0 0.0
        %472 = vmatprep.subr.mxu0 0.0
        %473 = vmatpush1.msra.mxu0 0.0
        %474 = vmatprep.subr.mxu0 0.0
        %475 = vmatpush1.msra.mxu0 0.0
        %476 = vmatprep.subr.mxu0 0.0
        %477 = vmatpush1.msra.mxu0 0.0
        %478 = vmatprep.mubr.f32.mxu0 0.0
        %479 = vmatmul.mubr.f32.gmra.mrb[0].mxu0 %v412
        %v480 = vpop.f32.mrb[0].mxu0
        %v481 = vadd.f32 %v408, %v480
        %v482 = vpop.f32.mrb[0].mxu0
        %v483 = vadd.f32 %v408, %v482
        %484 = vdwg.mxu0
        %v487 = vcombine.low %v481, %v483
        %489 = vst [vmem:[%s242] sm:$0xff] %v487
        %s490 = sand.u32 %s153, 1
        %s491 = scalar_lea.sflag [#allocation3], %s490
        %s492 = sand.u32 %s153, 1
        %s493 = smul.addr %s492, 8
        %s494 = scalar_lea.vmem [#allocation2], %s493
        // Predicated region
        $region41: #{tpu_custom_call.1} parent=39 // pred_check
          %p495 = pneg %p163
        $region42: #{tpu_custom_call.1} parent=39 // pred_check_branch
          %497 = sbr.rel (%p495) target = $region44
        $region43: #{tpu_custom_call.1} parent=39 // pred_region
          %s498 = smul.u32 2, %s24
          %s500 = ssub.s32 128, 128
          %501 = vsyncadd %s491, %s500
          %s502 = smul.addr %s23, 2
          %s503 = sadd.s32 %s498, %s502
          %s504 = smul.addr %s503, 64
          %s505 = scalar_lea.hbm %s5, %s504
          %s507 = sshll.u32 %s494, 4
          %s508 = int_to_ptr.vmem [resolvable:$true] %s507
          %510 = dma.vmem_to_hbm [thread:$0]  %s508, 128, %s505, %s491
        $region44: #{tpu_custom_call.1} parent=39 // pred_fallthru
          _
      $region40: #{tpu_custom_call.1} parent=5 // pred_fallthru
        _
      %p511 = scmp.le.s32.totalorder 2, %s14
      // Predicated region
      $region45: #{tpu_custom_call.1} parent=5 // pred_check
        %p512 = pneg %p511
      $region46: #{tpu_custom_call.1} parent=5 // pred_check_branch
        %514 = sbr.rel (%p512) target = $region48
      $region47: #{tpu_custom_call.1} parent=5 // pred_region
        %s515 = ssub.s32 %s14, 2
        // Predicated region
        $region49: #{tpu_custom_call.1} parent=47 // pred_check
          %p516 = pneg %p169
        $region50: #{tpu_custom_call.1} parent=47 // pred_check_branch
          %518 = sbr.rel (%p516) target = $region52
        $region51: #{tpu_custom_call.1} parent=47 // pred_region
          %s519 = sand.u32 %s154, 1
          %s520 = scalar_lea.sflag [#allocation3], %s519
          %s521 = sand.u32 %s154, 1
          %s522 = smul.addr %s521, 8
          %s523 = scalar_lea.vmem [#allocation2], %s522
          %524 = dma.done %s520, 128
        $region52: #{tpu_custom_call.1} parent=47 // pred_fallthru
          _
      $region48: #{tpu_custom_call.1} parent=5 // pred_fallthru
        _
    $region6: #{tpu_custom_call.1} parent=1 // loop_footer
      %s18 = sadd.s32 1, %s14
    $region7: #{tpu_custom_call.1} parent=1 // loop_footer_branch
      %13 = sbr.rel target = $region3
    $region8: #{tpu_custom_call.1} parent=1 // loop_exit
      _
    %525 = vsyncpa [#allocation3], 1
    %s526 = scalar_lea.sflag [#allocation3], 1
    %527 = vsyncpa %s526, 1

</llo_original>
